<compile_context>
chip_gen: v5e
topology: v5e:2x2
jax: 0.10.0
libtpu: 0.0.40
codegen_flags: <defaults>
</compile_context>

<pallas_src>
import jax
import jax.numpy as jnp
from jax.experimental import pallas as pl
from jax.experimental.pallas import tpu as pltpu


def _fusion_bn_kernel(xl_ref, p_ref, wl_ref, o_ref):
    # xl_ref: (Cl, HW_tile)  local features, channels-first (lane = spatial)
    # p_ref : (Co, 3)        [:,0]=g (x_global@Wg + b_conv), [:,1]=BN scale,
    #                        [:,2]=BN shift   (all f32)
    # wl_ref: (Co, Cl)       1x1-conv weight slice for the local channels
    # o_ref : (Co, HW_tile)
    acc = jnp.dot(wl_ref[...], xl_ref[...],
                  preferred_element_type=jnp.float32)          # (Co, HW_tile)
    p = p_ref[...]
    g, scale, shift = p[:, 0:1], p[:, 1:2], p[:, 2:3]          # (Co, 1) each
    fused = jnp.maximum(acc + g, 0.0)                          # conv bias + ReLU
    o_ref[...] = (fused * scale + shift).astype(o_ref.dtype)   # eval-mode BN


def _vmem_capacity_bytes(default=64 * 1024 * 1024):
    """Physical VMEM of the attached TPU (v5e/v6e: 128 MiB, v7x: 64 MiB)."""
    try:
        cap = getattr(pltpu.get_tpu_info(), "vmem_capacity_bytes", None)
        if cap:
            return int(cap)
    except Exception:
        pass
    return default


def _pick_hw_tile(hw, bytes_per_lane, tile_budget_bytes, batch,
                  min_total_steps=8, max_tile=8192):
    """Largest lane-dense (multiple-of-128) spatial tile that (a) fits the VMEM
    budget with the requested buffering depth and (b) leaves enough grid steps
    to shard across v7x's two TensorCores and give the pipeline depth."""
    if hw <= 128:
        return hw                                  # full-extent block is legal
    by_vmem = max(128, (tile_budget_bytes // max(bytes_per_lane, 1)) // 128 * 128)
    steps_per_batch = max(1, pl.cdiv(min_total_steps, batch))
    by_grid = max(128, (hw // steps_per_batch) // 128 * 128)
    hw_pad = pl.cdiv(hw, 128) * 128
    return int(min(by_vmem, by_grid, hw_pad, max_tile))


def fusion_layer_norm(x_local, x_global, w_conv, b_conv,
                      bn_gamma, bn_beta, bn_mean, bn_var, eps=1e-5,
                      out_dtype=None, n_buffers=3):
    """x_local : [B, Cl, H, W]   (NCHW, as PyTorch provides it)
       x_global: [B, Cg]
       w_conv  : [Co, Cl+Cg]     (PyTorch Conv2d 1x1 weight squeezed)
       b_conv  : [Co]
       bn_*    : [Co]            BatchNorm2d affine + running stats (eval mode)
       returns : [B, Co, H, W]   (NCHW)"""
    B, Cl, H, W = x_local.shape
    Co = w_conv.shape[0]
    HW = H * W
    out_dtype = jnp.dtype(out_dtype or x_local.dtype)

    xl = x_local.reshape(B, Cl, HW)                # channels-first, no transpose
    wl = w_conv[:, :Cl].astype(x_local.dtype)      # (Co, Cl)
    wg = w_conv[:, Cl:]                            # (Co, Cg)

    # tiny per-batch global term + conv bias, hoisted out of the kernel (f32)
    g = (x_global.astype(jnp.float32) @ wg.astype(jnp.float32).T
         + b_conv.astype(jnp.float32))                              # [B, Co]
    # BatchNorm (inference) folded to per-channel affine applied after ReLU
    inv_std = 1.0 / jnp.sqrt(bn_var.astype(jnp.float32) + eps)
    scale = bn_gamma.astype(jnp.float32) * inv_std                  # [Co]
    shift = bn_beta.astype(jnp.float32) - bn_mean.astype(jnp.float32) * scale
    params = jnp.stack([g,
                        jnp.broadcast_to(scale[None, :], (B, Co)),
                        jnp.broadcast_to(shift[None, :], (B, Co))],
                       axis=-1)                                     # [B, Co, 3]

    in_itemsize = jnp.dtype(x_local.dtype).itemsize
    out_itemsize = out_dtype.itemsize

    # Per-generation VMEM budget: request half of physical as the scoped limit,
    # and keep the streamed buffers within half of that.
    vmem_limit = min(_vmem_capacity_bytes() // 2, 96 * 1024 * 1024)
    tile_budget = vmem_limit // 2
    bytes_per_lane = n_buffers * (Cl * in_itemsize + Co * out_itemsize)
    hw_tile = _pick_hw_tile(HW, bytes_per_lane, tile_budget, B)
    n_hw = pl.cdiv(HW, hw_tile)        # last (partial) tile is masked by Pallas

    cost = pl.CostEstimate(
        flops=2 * B * Co * Cl * HW,
        transcendentals=0,
        bytes_accessed=int(B * HW * (Cl * in_itemsize + Co * out_itemsize)),
    )

    def build(use_buffered):
        stream = ({"pipeline_mode": pl.Buffered(n_buffers)}
                  if use_buffered else {})
        return pl.pallas_call(
            _fusion_bn_kernel,
            out_shape=jax.ShapeDtypeStruct((B, Co, HW), out_dtype),
            grid_spec=pltpu.PrefetchScalarGridSpec(
                num_scalar_prefetch=0,
                grid=(B, n_hw),
                in_specs=[
                    pl.BlockSpec((pl.Squeezed(), Cl, hw_tile),
                                 lambda b, t: (b, 0, t), **stream),
                    pl.BlockSpec((pl.Squeezed(), Co, 3), lambda b, t: (b, 0, 0)),
                    pl.BlockSpec((Co, Cl), lambda b, t: (0, 0)),
                ],
                out_specs=pl.BlockSpec((pl.Squeezed(), Co, hw_tile),
                                       lambda b, t: (b, 0, t), **stream),
            ),
            compiler_params=pltpu.CompilerParams(
                dimension_semantics=("parallel", "parallel"),
                vmem_limit_bytes=int(vmem_limit),
            ),
            cost_estimate=cost,
        )

    try:
        out = jax.block_until_ready(build(True)(xl, params, wl))
    except Exception:
        # Buffered(n)/pipeline_mode not supported here -> default 2-deep pipeline
        out = jax.block_until_ready(build(False)(xl, params, wl))

    return out.reshape(B, Co, H, W)


if __name__ == "__main__":
    # small shapes consistent with the module's forward (depth_before = Cl + Cg)
    B, H, W = 2, 32, 32
    Cl, Cg = 24, 8                  # depth_before_fusion = 32
    Co = 16                         # depth_after_fusion  = 16
    eps = 1e-5

    key = jax.random.PRNGKey(0)
    ks = jax.random.split(key, 8)
    x_local = jax.random.normal(ks[0], (B, Cl, H, W), dtype=jnp.float32)
    x_global = jax.random.normal(ks[1], (B, Cg), dtype=jnp.float32)
    w_conv = jax.random.normal(ks[2], (Co, Cl + Cg), dtype=jnp.float32) * 0.05
    b_conv = jax.random.normal(ks[3], (Co,), dtype=jnp.float32) * 0.05
    bn_gamma = 1.0 + 0.1 * jax.random.normal(ks[4], (Co,), dtype=jnp.float32)
    bn_beta = 0.1 * jax.random.normal(ks[5], (Co,), dtype=jnp.float32)
    bn_mean = 0.1 * jax.random.normal(ks[6], (Co,), dtype=jnp.float32)
    bn_var = jnp.abs(jax.random.normal(ks[7], (Co,), dtype=jnp.float32)) + 0.5

    out = fusion_layer_norm(x_local, x_global, w_conv, b_conv,
                            bn_gamma, bn_beta, bn_mean, bn_var, eps=eps)
    out = jax.block_until_ready(out)

    # pure-JAX reference: concat + 1x1 conv + ReLU + BatchNorm2d (eval mode)
    xg_exp = jnp.broadcast_to(x_global[:, :, None, None], (B, Cg, H, W))
    cat = jnp.concatenate([x_local, xg_exp], axis=1)            # [B, Cl+Cg, H, W]
    conv = jnp.einsum("oc,bchw->bohw", w_conv, cat) + b_conv[None, :, None, None]
    fused = jnp.maximum(conv, 0.0)
    ref = (fused - bn_mean[None, :, None, None]) * \
          (bn_gamma / jnp.sqrt(bn_var + eps))[None, :, None, None] + \
          bn_beta[None, :, None, None]
    assert jnp.allclose(out, ref, atol=1e-4, rtol=1e-4), "mismatch vs reference"

    print("KERNEL_OK")
</pallas_src>

<mosaic_0001>
module attributes {stable_mosaic.version = 11 : i64} {
  func.func @_fusion_bn_kernel(%arg0: i32, %arg1: i32, %arg2: memref<1x24x256xf32, #tpu.memory_space<vmem>>, %arg3: memref<1x16x3xf32, #tpu.memory_space<vmem>>, %arg4: memref<16x24xf32, #tpu.memory_space<vmem>>, %arg5: memref<1x16x256xf32, #tpu.memory_space<vmem>>) attributes {dimension_semantics = [#tpu.dimension_semantics<parallel>, #tpu.dimension_semantics<parallel>], iteration_bounds = array<i64: 2, 4>, scalar_prefetch = 0 : i64, scratch_operands = 0 : i64, tpu.core_type = #tpu.core_type<tc>, window_params = [{transform_indices = @transform_0, window_bounds = array<i64: 1, 24, 256>}, {transform_indices = @transform_1, window_bounds = array<i64: 1, 16, 3>}, {pipeline_mode = #tpu.pipeline_mode<synchronous>, transform_indices = @transform_2, window_bounds = array<i64: 16, 24>}, {transform_indices = @transform_3, window_bounds = array<i64: 1, 16, 256>}]} {
    %c0 = arith.constant 0 : index
    %c0_0 = arith.constant 0 : index
    %0 = vector.load %arg4[%c0, %c0_0] : memref<16x24xf32, #tpu.memory_space<vmem>>, vector<16x24xf32>
    %c0_1 = arith.constant 0 : index
    %c0_2 = arith.constant 0 : index
    %c0_3 = arith.constant 0 : index
    %1 = vector.load %arg2[%c0_1, %c0_2, %c0_3] : memref<1x24x256xf32, #tpu.memory_space<vmem>>, vector<1x24x256xf32>
    %2 = vector.shape_cast %1 : vector<1x24x256xf32> to vector<24x256xf32>
    %cst = arith.constant dense<0.000000e+00> : vector<16x256xf32>
    %3 = tpu.matmul %0, %2, %cst {dimension_numbers = #tpu.dot_dimension_numbers<[1], [0], [0], [1], [0, 0, 1, 1], [], []>} : vector<16x24xf32>, vector<24x256xf32>, vector<16x256xf32> -> vector<16x256xf32>
    %c0_4 = arith.constant 0 : index
    %c0_5 = arith.constant 0 : index
    %c0_6 = arith.constant 0 : index
    %4 = vector.load %arg3[%c0_4, %c0_5, %c0_6] : memref<1x16x3xf32, #tpu.memory_space<vmem>>, vector<1x16x3xf32>
    %5 = vector.shape_cast %4 : vector<1x16x3xf32> to vector<16x3xf32>
    %6 = vector.extract_strided_slice %5 {offsets = [0, 0], sizes = [16, 1], strides = [1, 1]} : vector<16x3xf32> to vector<16x1xf32>
    %7 = vector.extract_strided_slice %5 {offsets = [0, 1], sizes = [16, 1], strides = [1, 1]} : vector<16x3xf32> to vector<16x1xf32>
    %8 = vector.extract_strided_slice %5 {offsets = [0, 2], sizes = [16, 1], strides = [1, 1]} : vector<16x3xf32> to vector<16x1xf32>
    %9 = vector.broadcast %6 : vector<16x1xf32> to vector<16x256xf32>
    %10 = arith.addf %3, %9 : vector<16x256xf32>
    %cst_7 = arith.constant 0.000000e+00 : f32
    %11 = vector.broadcast %cst_7 : f32 to vector<16x256xf32>
    %12 = arith.maximumf %10, %11 : vector<16x256xf32>
    %13 = vector.broadcast %7 : vector<16x1xf32> to vector<16x256xf32>
    %14 = arith.mulf %12, %13 : vector<16x256xf32>
    %15 = vector.broadcast %8 : vector<16x1xf32> to vector<16x256xf32>
    %16 = arith.addf %14, %15 : vector<16x256xf32>
    %c0_8 = arith.constant 0 : index
    %c0_9 = arith.constant 0 : index
    %c0_10 = arith.constant 0 : index
    %17 = vector.load %arg5[%c0_8, %c0_9, %c0_10] : memref<1x16x256xf32, #tpu.memory_space<vmem>>, vector<1x16x256xf32>
    %18 = vector.shape_cast %17 : vector<1x16x256xf32> to vector<16x256xf32>
    %19 = vector.shape_cast %16 : vector<16x256xf32> to vector<1x16x256xf32>
    tpu.vector_store %arg5[%c0_8, %c0_9, %c0_10], %19 {strides = array<i32>} : memref<1x16x256xf32, #tpu.memory_space<vmem>>, vector<1x16x256xf32>,
    return
  }
  func.func @transform_0(%arg0: i32, %arg1: i32) -> (i32, i32, i32) {
    %c0_i32 = arith.constant 0 : i32
    %c0_i32_0 = arith.constant 0 : i32
    return %arg0, %c0_i32, %arg1 : i32, i32, i32
  }
  func.func @transform_1(%arg0: i32, %arg1: i32) -> (i32, i32, i32) {
    %c0_i32 = arith.constant 0 : i32
    %c0_i32_0 = arith.constant 0 : i32
    %c0_i32_1 = arith.constant 0 : i32
    return %arg0, %c0_i32, %c0_i32_0 : i32, i32, i32
  }
  func.func @transform_2(%arg0: i32, %arg1: i32) -> (i32, i32) {
    %c0_i32 = arith.constant 0 : i32
    %c0_i32_0 = arith.constant 0 : i32
    %c0_i32_1 = arith.constant 0 : i32
    return %c0_i32, %c0_i32_0 : i32, i32
  }
  func.func @transform_3(%arg0: i32, %arg1: i32) -> (i32, i32, i32) {
    %c0_i32 = arith.constant 0 : i32
    %c0_i32_0 = arith.constant 0 : i32
    return %arg0, %c0_i32, %arg1 : i32, i32, i32
  }
}

</mosaic_0001>

<llo_original>
// kernel: tpu_custom_call.1
$region0: #{tpu_custom_call.1}
  #allocation0 [shape = 'u32[]', space=smem, size = 0x4, offset = 0x4, fixed_abs, tag = 'smem constant byte address 0x4 - core index']
  #allocation1 [shape = 'u32[72,128]{1,0:T(1,128)}', space=vmem, size = 0x9000, scoped, tag = 'internal scratch']
  %s0 = inlined_call_operand.hbm [shape: f32[2,24,1024], index: 0, kind: input, shape index: {}]
  %s1 = inlined_call_operand.vmem [shape: f32[2,16,3], index: 1, kind: input, shape index: {}]
  %s2 = inlined_call_operand.vmem [shape: f32[16,24], index: 2, kind: input, shape index: {}]
  %s3 = inlined_call_operand.hbm [shape: f32[2,16,1024], index: 3, kind: output, shape index: {}]
  %s4 = sld [smem:[#allocation0]]
  $region49: #{tpu_custom_call.1} parent=0
    _
  %s6 = ssub.s32 1, %s4
  %s7 = scalar_select 0, %s6, %s4
  $region1: #{tpu_custom_call.1} parent=0
    #allocation2 [shape = 'u8[49152]{0}', space=vmem, size = 0xc000, scoped, tag = 'input window, operand 0']
    #allocation3 [shape = 's32[2]{0}', space=sflag, size = 0x8, scoped, tag = 'scoped memory for tpu_custom_call.1']
    #allocation4 [shape = 's32[2]{0}', space=sflag, size = 0x8, scoped, tag = 'scoped memory for tpu_custom_call.1']
    #allocation5 [shape = 'u8[32768]{0}', space=vmem, size = 0x8000, scoped, tag = 'output window, operand 0']
    %8 = vsyncpa [#allocation3], 0
    %s9 = scalar_lea.sflag [#allocation3], 1
    %10 = vsyncpa %s9, 0
    %11 = vsyncpa [#allocation4], 0
    %s12 = scalar_lea.sflag [#allocation4], 1
    %13 = vsyncpa %s12, 0
    loop: start=0, step=1, limit=10
    $region2: #{tpu_custom_call.1} parent=1 // loop_pre_header
      _
    $region3: #{tpu_custom_call.1} parent=1 // loop_header
      %s15 = sphi 0, %s19
      %p16 = scmp.ge.s32.totalorder %s15, 10
      %s22 = sphi 0, %s34
      %s23 = sphi 0, %s30
      %s24 = sphi 0, %s22
      %s25 = sphi 0, %s23
      %s26 = sphi 0, %s24
      %s27 = sphi 0, %s25
      %s39 = sphi 0, %s41
      %s42 = sphi 0, %s39
      %s43 = sphi 0, %s42
      %s59 = sphi 0, %s43
      %s65 = sphi 0, %s67
      %s68 = sphi 0, %s65
      %s69 = sphi 0, %s68
      %s85 = sphi 0, %s69
      %s89 = sphi 0, %s89
      %s91 = sphi 0, %s89
      %s92 = sphi 0, %s91
      %s106 = sphi 0, %s92
      %s114 = sphi 0, %s116
      %s117 = sphi 0, %s114
      %s118 = sphi 0, %s117
      %s134 = sphi 0, %s118
    $region4: #{tpu_custom_call.1} parent=1 // loop_header_branch
      %18 = sbr.rel (%p16) target = $region8
    $region5: #{tpu_custom_call.1} parent=1 // loop_body
      %s20 = ssub.s32 %s15, 1
      %s21 = ssub.s32 %s15, 2
      %s28 = sadd.s32 1, %s23
      %p29 = scmp.ge.s32.totalorder %s28, 4
      %s30 = scalar_select %p29, 0, %s28
      %s31 = sadd.s32 1, %s22
      %s32 = scalar_select %p29, %s31, %s22
      %p33 = scmp.ge.s32.totalorder %s32, 2
      %s34 = scalar_select %p33, 0, %s32
      %s35 = ssub.s32 %s22, %s34
      %s36 = ssub.s32 %s23, %s30
      %s37 = sor.u32 %s35, %s36
      %p38 = scmp.eq.s32.totalorder %s37, 0
      %s40 = sadd.s32 %s39, 1
      %s41 = scalar_select %p38, %s39, %s40
      %p44 = pneg %p38
      %p45 = scmp.eq.s32.totalorder %s15, 7
      %p46 = por %p44, %p45
      %p47 = scmp.ne.s32.totalorder %s39, %s42
      %p48 = scmp.eq.s32.totalorder %s15, 0
      %p49 = por %p47, %p48
      %p50 = scmp.ne.s32.totalorder %s39, %s42
      %p51 = scmp.eq.s32.totalorder %s20, 7
      %p52 = por %p50, %p51
      %p53 = scmp.ne.s32.totalorder %s42, %s43
      %p54 = scmp.eq.s32.totalorder %s20, 0
      %p55 = por %p53, %p54
      %p56 = scmp.ne.s32.totalorder %s42, %s43
      %p57 = scmp.eq.s32.totalorder %s21, 7
      %p58 = por %p56, %p57
      %p60 = scmp.ne.s32.totalorder %s43, %s59
      %p61 = scmp.eq.s32.totalorder %s21, 0
      %p62 = por %p60, %p61
      %s63 = ssub.s32 %s22, %s34
      %p64 = scmp.eq.s32.totalorder %s63, 0
      %s66 = sadd.s32 %s65, 1
      %s67 = scalar_select %p64, %s65, %s66
      %p70 = pneg %p64
      %p71 = scmp.eq.s32.totalorder %s15, 7
      %p72 = por %p70, %p71
      %p73 = scmp.ne.s32.totalorder %s65, %s68
      %p74 = scmp.eq.s32.totalorder %s15, 0
      %p75 = por %p73, %p74
      %p76 = scmp.ne.s32.totalorder %s65, %s68
      %p77 = scmp.eq.s32.totalorder %s20, 7
      %p78 = por %p76, %p77
      %p79 = scmp.ne.s32.totalorder %s68, %s69
      %p80 = scmp.eq.s32.totalorder %s20, 0
      %p81 = por %p79, %p80
      %p82 = scmp.ne.s32.totalorder %s68, %s69
      %p83 = scmp.eq.s32.totalorder %s21, 7
      %p84 = por %p82, %p83
      %p86 = scmp.ne.s32.totalorder %s69, %s85
      %p87 = scmp.eq.s32.totalorder %s21, 0
      %p88 = por %p86, %p87
      %s90 = sadd.s32 %s89, 1
      %p93 = scmp.eq.s32.totalorder %s15, 7
      %p94 = scmp.ne.s32.totalorder %s89, %s91
      %p95 = scmp.eq.s32.totalorder %s15, 0
      %p96 = por %p94, %p95
      %p97 = scmp.ne.s32.totalorder %s89, %s91
      %p98 = scmp.eq.s32.totalorder %s20, 7
      %p99 = por %p97, %p98
      %p100 = scmp.ne.s32.totalorder %s91, %s92
      %p101 = scmp.eq.s32.totalorder %s20, 0
      %p102 = por %p100, %p101
      %p103 = scmp.ne.s32.totalorder %s91, %s92
      %p104 = scmp.eq.s32.totalorder %s21, 7
      %p105 = por %p103, %p104
      %p107 = scmp.ne.s32.totalorder %s92, %s106
      %p108 = scmp.eq.s32.totalorder %s21, 0
      %p109 = por %p107, %p108
      %s110 = ssub.s32 %s22, %s34
      %s111 = ssub.s32 %s23, %s30
      %s112 = sor.u32 %s110, %s111
      %p113 = scmp.eq.s32.totalorder %s112, 0
      %s115 = sadd.s32 %s114, 1
      %s116 = scalar_select %p113, %s114, %s115
      %p119 = pneg %p113
      %p120 = scmp.eq.s32.totalorder %s15, 7
      %p121 = por %p119, %p120
      %p122 = scmp.ne.s32.totalorder %s114, %s117
      %p123 = scmp.eq.s32.totalorder %s15, 0
      %p124 = por %p122, %p123
      %p125 = scmp.ne.s32.totalorder %s114, %s117
      %p126 = scmp.eq.s32.totalorder %s20, 7
      %p127 = por %p125, %p126
      %p128 = scmp.ne.s32.totalorder %s117, %s118
      %p129 = scmp.eq.s32.totalorder %s20, 0
      %p130 = por %p128, %p129
      %p131 = scmp.ne.s32.totalorder %s117, %s118
      %p132 = scmp.eq.s32.totalorder %s21, 7
      %p133 = por %p131, %p132
      %p135 = scmp.ne.s32.totalorder %s118, %s134
      %p136 = scmp.eq.s32.totalorder %s21, 0
      %p137 = por %p135, %p136
      %p138 = scmp.le.s32.totalorder 1, %s15
      %p139 = scmp.lt.s32.totalorder %s15, 9
      %p140 = pnand %p138, %p139
      %p141 = pneg %p140
      // Predicated region
      $region9: #{tpu_custom_call.1} parent=5 // pred_check
        _
      $region10: #{tpu_custom_call.1} parent=5 // pred_check_branch
        %143 = sbr.rel (%p140) target = $region12
      $region11: #{tpu_custom_call.1} parent=5 // pred_region
        %s144 = ssub.s32 %s15, 1
        // Predicated region
        $region13: #{tpu_custom_call.1} parent=11 // pred_check
          %p145 = pneg %p102
        $region14: #{tpu_custom_call.1} parent=11 // pred_check_branch
          %147 = sbr.rel (%p145) target = $region16
        $region15: #{tpu_custom_call.1} parent=11 // pred_region
          _
        $region16: #{tpu_custom_call.1} parent=11 // pred_fallthru
          _
      $region12: #{tpu_custom_call.1} parent=5 // pred_fallthru
        _
      %p148 = scmp.lt.s32.totalorder %s15, 8
      // Predicated region
      $region17: #{tpu_custom_call.1} parent=5 // pred_check
        %p149 = pneg %p148
      $region18: #{tpu_custom_call.1} parent=5 // pred_check_branch
        %151 = sbr.rel (%p149) target = $region20
      $region19: #{tpu_custom_call.1} parent=5 // pred_region
        // Predicated region
        $region21: #{tpu_custom_call.1} parent=19 // pred_check
          %p152 = pneg %p49
        $region22: #{tpu_custom_call.1} parent=19 // pred_check_branch
          %154 = sbr.rel (%p152) target = $region24
        $region23: #{tpu_custom_call.1} parent=19 // pred_region
          %s155 = sand.u32 %s39, 1
          %s156 = scalar_lea.sflag [#allocation3], %s155
          %s157 = sand.u32 %s39, 1
          %s158 = smul.addr %s157, 48
          %s159 = scalar_lea.vmem [#allocation2], %s158
          %s160 = smul.u32 2, %s23
          %162 = vsyncadd %s156, 0
          %s163 = smul.addr %s22, 24
          %s164 = sadd.s32 %s160, %s163
          %s165 = smul.addr %s164, 8
          %s166 = scalar_lea.hbm %s0, %s165
          %s167 = sshll.u32 %s166, 4
          %s168 = int_to_ptr.hbm [resolvable:$true] %s167
          %s169 = sshll.u32 %s159, 4
          %s170 = int_to_ptr.vmem [resolvable:$true] %s169
          %175 = dma.hbm_to_vmem [thread:$0]  %s168, 768, %s170, %s156, 1024, 256, 16
        $region24: #{tpu_custom_call.1} parent=19 // pred_fallthru
          _
        // Predicated region
        $region25: #{tpu_custom_call.1} parent=19 // pred_check
          %p176 = pneg %p75
        $region26: #{tpu_custom_call.1} parent=19 // pred_check_branch
          %178 = sbr.rel (%p176) target = $region28
        $region27: #{tpu_custom_call.1} parent=19 // pred_region
          %p179 = scmp.lt.s32.totalorder %s22, 1
          %s180 = scalar_select %p179, %s22, 1
          %s181 = smul.addr %s180, 2
          %s182 = smul.addr %s181, 8
          %s183 = scalar_lea.vmem %s1, %s182
        $region28: #{tpu_custom_call.1} parent=19 // pred_fallthru
          _
      $region20: #{tpu_custom_call.1} parent=5 // pred_fallthru
        _
      %p184 = scmp.le.s32.totalorder 1, %s15
      %p185 = scmp.lt.s32.totalorder %s15, 9
      %p186 = pnand %p184, %p185
      %p187 = pneg %p186
      // Predicated region
      $region29: #{tpu_custom_call.1} parent=5 // pred_check
        _
      $region30: #{tpu_custom_call.1} parent=5 // pred_check_branch
        %189 = sbr.rel (%p186) target = $region32
      $region31: #{tpu_custom_call.1} parent=5 // pred_region
        %s190 = ssub.s32 %s15, 1
        %s191 = sand.u32 %s42, 1
        %s192 = scalar_lea.sflag [#allocation3], %s191
        %s193 = sand.u32 %s42, 1
        %s194 = smul.addr %s193, 48
        %s195 = scalar_lea.vmem [#allocation2], %s194
        // Predicated region
        $region33: #{tpu_custom_call.1} parent=31 // pred_check
          %p196 = pneg %p55
        $region34: #{tpu_custom_call.1} parent=31 // pred_check_branch
          %198 = sbr.rel (%p196) target = $region36
        $region35: #{tpu_custom_call.1} parent=31 // pred_region
          %200 = dma.done %s192, 768
        $region36: #{tpu_custom_call.1} parent=31 // pred_fallthru
          _
        %s201 = sand.u32 %s42, 1
        %s202 = scalar_lea.sflag [#allocation3], %s201
        %s203 = sand.u32 %s42, 1
        %s204 = smul.addr %s203, 48
        %s205 = scalar_lea.vmem [#allocation2], %s204
        %p206 = pneg %p55
        %p207 = pneg %p52
        %p208 = scmp.lt.s32.totalorder %s24, 1
        %s209 = scalar_select %p208, %s24, 1
        %s210 = smul.addr %s209, 2
        %s211 = smul.addr %s210, 8
        %s212 = scalar_lea.vmem %s1, %s211
        %p213 = pneg %p81
        %p214 = pneg %p78
        %p215 = pneg %p102
        %p216 = pneg %p99
        %p217 = pneg %p130
        %p218 = pneg %p127
        %s219 = sand.u32 %s117, 1
        %s220 = scalar_lea.sflag [#allocation4], %s219
        %s221 = sand.u32 %s117, 1
        %s222 = smul.addr %s221, 32
        %s223 = scalar_lea.vmem [#allocation5], %s222
        %s224 = smul.u32 2, %s25
        %p225 = scmp.lt.s32.totalorder %s24, 1
        %s226 = scalar_select %p225, %s24, 1
        %s227 = smul.addr %s226, 2
        %s228 = smul.addr %s227, 8
        %s229 = scalar_lea.vmem %s1, %s228
        %s230 = smul.u32 2, %s25
        %v231 = vld [vmem:[%s2] sm:$0xff]
        %v232 = vld [vmem:[%s2 + $0x8] sm:$0xff]
        %v233 = vld [vmem:[%s195] sm:$0xff]
        %v234 = vld [vmem:[%s195 + $0x8] sm:$0xff]
        %v235 = vld [vmem:[%s195 + $0x10] sm:$0xff]
        %v236 = vld [vmem:[%s195 + $0x18] sm:$0xff]
        %v237 = vld [vmem:[%s195 + $0x20] sm:$0xff]
        %v238 = vld [vmem:[%s195 + $0x28] sm:$0xff]
        %v239 = vld [vmem:[%s229] sm:$0xff]
        %v240 = vld [vmem:[%s229 + $0x8] sm:$0xff]
        %242 = vset.pattern.permute.xlu0 0
        %243 = vperm.xlu0 %242, %v239
        %v244 = vpop.permute.xlu0 %243
        %247 = vset.pattern.permute.xlu0 0
        %248 = vperm.xlu0 %247, %v240
        %v249 = vpop.permute.xlu0 %248
        %vm251 = vcmask 195584
        %v253 = vsel %vm251, %v231, 0
        %v256 = vsel %vm251, %v232, 0
        %258 = vmatpush.msra.mxu0 0.0
        %259 = vmatpush.msra.mxu0 0.0
        %260 = vmatpush.msra.mxu0 0.0
        %261 = vmatpush.msra.mxu0 0.0
        %262 = vmatpush.msra.mxu0 0.0
        %263 = vmatpush.msra.mxu0 0.0
        %264 = vmatpush.msra.mxu0 0.0
        %265 = vmatpush.msra.mxu0 0.0
        %266 = vmatpush.msra.mxu0 0.0
        %267 = vmatpush.msra.mxu0 0.0
        %268 = vmatpush.msra.mxu0 0.0
        %269 = vmatpush.msra.mxu0 0.0
        %270 = vmatpush.msra.mxu0 0.0
        %271 = vmatpush.msra.mxu0 %v237
        %272 = vmatpush.msra.mxu0 %v235
        %273 = vmatpush.msra.mxu0 %v233
        %274 = vmatmul.f32.gmra.mxu0 %v253
        %v275 = vpop.f32.mrf.mxu0
        %v276 = vadd.f32 %v244, %v275
        %277 = vmatmul.f32.gmra.mxu0 %v256
        %v278 = vpop.f32.mrf.mxu0
        %v279 = vadd.f32 %v249, %v278
        %280 = vdwg.mxu0
        %281 = vmatpush.msra.mxu0 0.0
        %282 = vmatpush.msra.mxu0 0.0
        %283 = vmatpush.msra.mxu0 0.0
        %284 = vmatpush.msra.mxu0 0.0
        %285 = vmatpush.msra.mxu0 0.0
        %286 = vmatpush.msra.mxu0 0.0
        %287 = vmatpush.msra.mxu0 0.0
        %288 = vmatpush.msra.mxu0 0.0
        %289 = vmatpush.msra.mxu0 0.0
        %290 = vmatpush.msra.mxu0 0.0
        %291 = vmatpush.msra.mxu0 0.0
        %292 = vmatpush.msra.mxu0 0.0
        %293 = vmatpush.msra.mxu0 0.0
        %294 = vmatpush.msra.mxu0 %v238
        %295 = vmatpush.msra.mxu0 %v236
        %296 = vmatpush.msra.mxu0 %v234
        %297 = vmatmul.f32.gmra.mxu0 %v253
        %v298 = vpop.f32.mrf.mxu0
        %v299 = vadd.f32 %v244, %v298
        %300 = vmatmul.f32.gmra.mxu0 %v256
        %v301 = vpop.f32.mrf.mxu0
        %v302 = vadd.f32 %v249, %v301
        %303 = vdwg.mxu0
        %v304 = vmax.f32 %v276, 0.0
        %v305 = vmax.f32 %v299, 0.0
        %v306 = vmax.f32 %v279, 0.0
        %v307 = vmax.f32 %v302, 0.0
        %308 = vset.pattern.permute.xlu0 1
        %309 = vperm.xlu0 %308, %v239
        %v310 = vpop.permute.xlu0 %309
        %312 = vset.pattern.permute.xlu0 1
        %313 = vperm.xlu0 %312, %v240
        %v314 = vpop.permute.xlu0 %313
        %v316 = vmul.f32 %v304, %v310
        %v317 = vmul.f32 %v305, %v310
        %v318 = vmul.f32 %v306, %v314
        %v319 = vmul.f32 %v307, %v314
        %320 = vset.pattern.permute.xlu0 2
        %321 = vperm.xlu0 %320, %v239
        %v322 = vpop.permute.xlu0 %321
        %324 = vset.pattern.permute.xlu0 2
        %325 = vperm.xlu0 %324, %v240
        %v326 = vpop.permute.xlu0 %325
        %v328 = vadd.f32 %v316, %v322
        %v329 = vadd.f32 %v317, %v322
        %v330 = vadd.f32 %v318, %v326
        %v331 = vadd.f32 %v319, %v326
        %332 = vst [vmem:[%s223] sm:$0xff] %v328
        %333 = vst [vmem:[%s223 + $0x8] sm:$0xff] %v329
        %334 = vst [vmem:[%s223 + $0x10] sm:$0xff] %v330
        %335 = vst [vmem:[%s223 + $0x18] sm:$0xff] %v331
        %s336 = sand.u32 %s117, 1
        %s337 = scalar_lea.sflag [#allocation4], %s336
        %s338 = sand.u32 %s117, 1
        %s339 = smul.addr %s338, 32
        %s340 = scalar_lea.vmem [#allocation5], %s339
        // Predicated region
        $region37: #{tpu_custom_call.1} parent=31 // pred_check
          %p341 = pneg %p127
        $region38: #{tpu_custom_call.1} parent=31 // pred_check_branch
          %343 = sbr.rel (%p341) target = $region40
        $region39: #{tpu_custom_call.1} parent=31 // pred_region
          %s344 = smul.u32 2, %s25
          %346 = vsyncadd %s337, 0
          %s347 = smul.addr %s24, 16
          %s348 = sadd.s32 %s344, %s347
          %s349 = smul.addr %s348, 8
          %s350 = scalar_lea.hbm %s3, %s349
          %s351 = sshll.u32 %s340, 4
          %s352 = int_to_ptr.vmem [resolvable:$true] %s351
          %s353 = sshll.u32 %s350, 4
          %s354 = int_to_ptr.hbm [resolvable:$true] %s353
          %359 = dma.vmem_to_hbm [thread:$0]  %s352, 512, %s354, %s337, 256, 1024, 16
        $region40: #{tpu_custom_call.1} parent=31 // pred_fallthru
          _
      $region32: #{tpu_custom_call.1} parent=5 // pred_fallthru
        _
      %p360 = scmp.le.s32.totalorder 2, %s15
      // Predicated region
      $region41: #{tpu_custom_call.1} parent=5 // pred_check
        %p361 = pneg %p360
      $region42: #{tpu_custom_call.1} parent=5 // pred_check_branch
        %363 = sbr.rel (%p361) target = $region44
      $region43: #{tpu_custom_call.1} parent=5 // pred_region
        %s364 = ssub.s32 %s15, 2
        // Predicated region
        $region45: #{tpu_custom_call.1} parent=43 // pred_check
          %p365 = pneg %p133
        $region46: #{tpu_custom_call.1} parent=43 // pred_check_branch
          %367 = sbr.rel (%p365) target = $region48
        $region47: #{tpu_custom_call.1} parent=43 // pred_region
          %s368 = sand.u32 %s118, 1
          %s369 = scalar_lea.sflag [#allocation4], %s368
          %s370 = sand.u32 %s118, 1
          %s371 = smul.addr %s370, 32
          %s372 = scalar_lea.vmem [#allocation5], %s371
          %374 = dma.done %s369, 512
        $region48: #{tpu_custom_call.1} parent=43 // pred_fallthru
          _
      $region44: #{tpu_custom_call.1} parent=5 // pred_fallthru
        _
    $region6: #{tpu_custom_call.1} parent=1 // loop_footer
      %s19 = sadd.s32 1, %s15
    $region7: #{tpu_custom_call.1} parent=1 // loop_footer_branch
      %14 = sbr.rel target = $region3
    $region8: #{tpu_custom_call.1} parent=1 // loop_exit
      _
    %375 = vsyncpa [#allocation3], 1
    %s376 = scalar_lea.sflag [#allocation3], 1
    %377 = vsyncpa %s376, 1
    %378 = vsyncpa [#allocation4], 1
    %s379 = scalar_lea.sflag [#allocation4], 1
    %380 = vsyncpa %s379, 1

</llo_original>
